<compile_context>
chip_gen: v7x
topology: tpu7x:2x2x1
jax: 0.10.0
libtpu: 0.0.40
codegen_flags: <defaults>
</compile_context>

<pallas_src>
import jax
import jax.numpy as jnp
from jax.experimental import pallas as pl
from jax.experimental.pallas import tpu as pltpu

N, C, H, W = 1, 48, 14, 14
HP, WP = H + 2, W + 2          # zero-padded spatial dims (16, 16)
QP = HP * WP                   # 256 flattened padded pixels (lane axis)
NVALID = N * H * W             # 196 valid pixels used for BN statistics
EPS = 1e-5


def _fused_kernel(x_ref, w1_ref, gamma_ref, beta_ref, dw_ref, mask_ref, out_ref):
    # x_ref:     (C, QP)  input, spatially zero-padded, flattened 16x16 grid
    # w1_ref:    (C, C)   1x1 conv weight, [cout, cin]
    # gamma_ref: (C, 1)   BN scale
    # beta_ref:  (C, 1)   BN shift
    # dw_ref:    (C, 9)   depthwise 3x3 weight, flattened [c, kh*3+kw]
    # mask_ref:  (1, QP)  1.0 at the 196 valid pixels, 0.0 on the border
    # out_ref:   (C, QP)  depthwise conv output in padded coordinates

    # ---- 1x1 conv: single MXU matmul, lane-dense (C, 256) result ----
    y = jnp.dot(w1_ref[...], x_ref[...], preferred_element_type=jnp.float32)

    # ---- BatchNorm2d (training-mode batch stats) folded into scale/bias ----
    # Border columns of y are exactly zero (zero input columns through the
    # matmul), so plain lane sums equal sums over the valid pixels; divide by
    # NVALID (196), not QP (256).
    inv_n = 1.0 / NVALID
    mean = jnp.sum(y, axis=1, keepdims=True) * inv_n               # (C, 1)
    var = jnp.sum(y * y, axis=1, keepdims=True) * inv_n - mean * mean
    scale = gamma_ref[...] * jax.lax.rsqrt(var + EPS)              # (C, 1)
    bias = beta_ref[...] - mean * scale                            # (C, 1)

    # ---- BN affine + ReLU, then re-zero the border pixels ----
    z = jnp.maximum(y * scale + bias, 0.0) * mask_ref[...]         # (C, QP)

    # ---- depthwise 3x3 conv via 9 static lane rolls ----
    # For output pixel q (padded coords), tap (kh, kw) reads flat index
    # q + (kh-1)*WP + (kw-1); offsets stay inside [0, QP) for all valid q and
    # out-of-image neighbours hit the zero border, so no masks are needed.
    dw = dw_ref[...]                                               # (C, 9)
    acc = None
    for kh in range(3):
        for kw in range(3):
            off = (kh - 1) * WP + (kw - 1)
            zt = z if off == 0 else pltpu.roll(z, shift=(-off) % QP, axis=1)
            t = kh * 3 + kw
            term = zt * dw[:, t:t + 1]                             # (C,QP)*(C,1)
            acc = term if acc is None else acc + term
    out_ref[...] = acc


@jax.jit
def fused_forward(x_nchw, w1_oi, gamma, beta, dw_oihw):
    """x_nchw: (1, 48, 14, 14). Returns (1, 48, 14, 14), matching PyTorch NCHW."""
    # No transposes: NCHW already has channels-major / pixels-minor.
    x_pad = jnp.pad(x_nchw.reshape(C, H, W), ((0, 0), (1, 1), (1, 1)))
    x_pad = x_pad.reshape(C, QP)                                   # (48, 256)
    w1 = w1_oi.reshape(C, C)                                       # [cout, cin]
    dw = dw_oihw.reshape(C, 9)                                     # [c, kh*3+kw]
    g = gamma.reshape(C, 1)
    b = beta.reshape(C, 1)
    mask = jnp.pad(jnp.ones((1, H, W), jnp.float32),
                   ((0, 0), (1, 1), (1, 1))).reshape(1, QP)

    out_flat = pl.pallas_call(
        _fused_kernel,
        out_shape=jax.ShapeDtypeStruct((C, QP), jnp.float32),
        in_specs=[pl.BlockSpec(memory_space=pltpu.MemorySpace.VMEM)] * 6,
        out_specs=pl.BlockSpec(memory_space=pltpu.MemorySpace.VMEM),
    )(x_pad, w1, g, b, dw, mask)

    out = out_flat.reshape(C, HP, WP)[:, 1:H + 1, 1:W + 1]
    return out[None]                                               # (1, C, H, W)


def reference(x_nchw, w1_oi, gamma, beta, dw_oihw):
    """Pure-jnp reference with identical semantics (PyTorch training-mode BN)."""
    y = jnp.einsum('oc,nchw->nohw', w1_oi, x_nchw)                 # 1x1 conv
    mean = jnp.mean(y, axis=(0, 2, 3), keepdims=True)
    var = jnp.mean((y - mean) ** 2, axis=(0, 2, 3), keepdims=True)
    z = (y - mean) * jax.lax.rsqrt(var + EPS) * gamma[None, :, None, None] \
        + beta[None, :, None, None]
    z = jnp.maximum(z, 0.0)
    zp = jnp.pad(z, ((0, 0), (0, 0), (1, 1), (1, 1)))
    out = jnp.zeros_like(z)
    for kh in range(3):
        for kw in range(3):
            out = out + zp[:, :, kh:kh + H, kw:kw + W] \
                * dw_oihw[:, 0, kh, kw][None, :, None, None]
    return out                                                     # NCHW


if __name__ == "__main__":
    key = jax.random.PRNGKey(0)
    k_x, k_w1, k_g, k_b, k_dw = jax.random.split(key, 5)

    # Deterministic synthetic parameters (shapes from the module __init__).
    x = jax.random.normal(k_x, (N, C, H, W), dtype=jnp.float32)
    w1_oi = 0.1 * jax.random.normal(k_w1, (C, C), dtype=jnp.float32)          # Conv2d(48,48,1,1) weight[:,:,0,0]
    gamma = 1.0 + 0.1 * jax.random.normal(k_g, (C,), dtype=jnp.float32)       # BN weight
    beta = 0.1 * jax.random.normal(k_b, (C,), dtype=jnp.float32)              # BN bias
    dw_oihw = 0.1 * jax.random.normal(k_dw, (C, 1, 3, 3), dtype=jnp.float32)  # depthwise conv weight

    out = jax.block_until_ready(fused_forward(x, w1_oi, gamma, beta, dw_oihw))
    ref = jax.block_until_ready(reference(x, w1_oi, gamma, beta, dw_oihw))

    assert out.shape == (N, C, H, W)
    assert jnp.allclose(out, ref, rtol=1e-3, atol=1e-3), float(jnp.max(jnp.abs(out - ref)))

    # TODO(synk): BatchNorm uses training-mode batch statistics (fresh torch
    # module called directly is in train mode); eval-mode running stats would
    # fold to a constant scale/bias instead.
    print("KERNEL_OK")
</pallas_src>

<mosaic_0001>
module attributes {stable_mosaic.version = 11 : i64} {
  func.func @_fused_kernel(%arg0: memref<48x256xf32, #tpu.memory_space<vmem>>, %arg1: memref<48x48xf32, #tpu.memory_space<vmem>>, %arg2: memref<48x1xf32, #tpu.memory_space<vmem>>, %arg3: memref<48x1xf32, #tpu.memory_space<vmem>>, %arg4: memref<48x9xf32, #tpu.memory_space<vmem>>, %arg5: memref<1x256xf32, #tpu.memory_space<vmem>>, %arg6: memref<48x256xf32, #tpu.memory_space<vmem>>) attributes {dimension_semantics = [], scalar_prefetch = 0 : i64, scratch_operands = 0 : i64, tpu.core_type = #tpu.core_type<tc>} {
    %c0 = arith.constant 0 : index
    %c0_0 = arith.constant 0 : index
    %0 = vector.load %arg1[%c0, %c0_0] : memref<48x48xf32, #tpu.memory_space<vmem>>, vector<48x48xf32>
    %c0_1 = arith.constant 0 : index
    %c0_2 = arith.constant 0 : index
    %1 = vector.load %arg0[%c0_1, %c0_2] : memref<48x256xf32, #tpu.memory_space<vmem>>, vector<48x256xf32>
    %cst = arith.constant dense<0.000000e+00> : vector<48x256xf32>
    %2 = tpu.matmul %0, %1, %cst {dimension_numbers = #tpu.dot_dimension_numbers<[1], [0], [0], [1], [0, 0, 1, 1], [], []>} : vector<48x48xf32>, vector<48x256xf32>, vector<48x256xf32> -> vector<48x256xf32>
    %cst_3 = arith.constant dense<0.000000e+00> : vector<48xf32>
    %3 = vector.multi_reduction <add>, %2, %cst_3 [1] : vector<48x256xf32> to vector<48xf32>
    %4 = vector.shape_cast %3 : vector<48xf32> to vector<48x1xf32>
    %cst_4 = arith.constant 0.00510204071 : f32
    %5 = vector.broadcast %cst_4 : f32 to vector<48x1xf32>
    %6 = arith.mulf %4, %5 : vector<48x1xf32>
    %7 = arith.mulf %2, %2 : vector<48x256xf32>
    %cst_5 = arith.constant dense<0.000000e+00> : vector<48xf32>
    %8 = vector.multi_reduction <add>, %7, %cst_5 [1] : vector<48x256xf32> to vector<48xf32>
    %9 = vector.shape_cast %8 : vector<48xf32> to vector<48x1xf32>
    %cst_6 = arith.constant 0.00510204071 : f32
    %10 = vector.broadcast %cst_6 : f32 to vector<48x1xf32>
    %11 = arith.mulf %9, %10 : vector<48x1xf32>
    %12 = arith.mulf %6, %6 : vector<48x1xf32>
    %13 = arith.subf %11, %12 : vector<48x1xf32>
    %c0_7 = arith.constant 0 : index
    %c0_8 = arith.constant 0 : index
    %14 = vector.load %arg2[%c0_7, %c0_8] : memref<48x1xf32, #tpu.memory_space<vmem>>, vector<48x1xf32>
    %cst_9 = arith.constant 9.99999974E-6 : f32
    %15 = vector.broadcast %cst_9 : f32 to vector<48x1xf32>
    %16 = arith.addf %13, %15 : vector<48x1xf32>
    %17 = math.rsqrt %16 : vector<48x1xf32>
    %18 = arith.mulf %14, %17 : vector<48x1xf32>
    %c0_10 = arith.constant 0 : index
    %c0_11 = arith.constant 0 : index
    %19 = vector.load %arg3[%c0_10, %c0_11] : memref<48x1xf32, #tpu.memory_space<vmem>>, vector<48x1xf32>
    %20 = arith.mulf %6, %18 : vector<48x1xf32>
    %21 = arith.subf %19, %20 : vector<48x1xf32>
    %22 = vector.broadcast %18 : vector<48x1xf32> to vector<48x256xf32>
    %23 = arith.mulf %2, %22 : vector<48x256xf32>
    %24 = vector.broadcast %21 : vector<48x1xf32> to vector<48x256xf32>
    %25 = arith.addf %23, %24 : vector<48x256xf32>
    %cst_12 = arith.constant 0.000000e+00 : f32
    %26 = vector.broadcast %cst_12 : f32 to vector<48x256xf32>
    %27 = arith.maximumf %25, %26 : vector<48x256xf32>
    %c0_13 = arith.constant 0 : index
    %c0_14 = arith.constant 0 : index
    %28 = vector.load %arg5[%c0_13, %c0_14] : memref<1x256xf32, #tpu.memory_space<vmem>>, vector<1x256xf32>
    %29 = vector.broadcast %28 : vector<1x256xf32> to vector<48x256xf32>
    %30 = arith.mulf %27, %29 : vector<48x256xf32>
    %c0_15 = arith.constant 0 : index
    %c0_16 = arith.constant 0 : index
    %31 = vector.load %arg4[%c0_15, %c0_16] : memref<48x9xf32, #tpu.memory_space<vmem>>, vector<48x9xf32>
    %c17_i32 = arith.constant 17 : i32
    %32 = tpu.dynamic_rotate %30 by %c17_i32 dim 1 : vector<48x256xf32>, i32 -> vector<48x256xf32>
    %33 = vector.extract_strided_slice %31 {offsets = [0, 0], sizes = [48, 1], strides = [1, 1]} : vector<48x9xf32> to vector<48x1xf32>
    %34 = vector.broadcast %33 : vector<48x1xf32> to vector<48x256xf32>
    %35 = arith.mulf %32, %34 : vector<48x256xf32>
    %c16_i32 = arith.constant 16 : i32
    %36 = tpu.dynamic_rotate %30 by %c16_i32 dim 1 : vector<48x256xf32>, i32 -> vector<48x256xf32>
    %37 = vector.extract_strided_slice %31 {offsets = [0, 1], sizes = [48, 1], strides = [1, 1]} : vector<48x9xf32> to vector<48x1xf32>
    %38 = vector.broadcast %37 : vector<48x1xf32> to vector<48x256xf32>
    %39 = arith.mulf %36, %38 : vector<48x256xf32>
    %40 = arith.addf %35, %39 : vector<48x256xf32>
    %c15_i32 = arith.constant 15 : i32
    %41 = tpu.dynamic_rotate %30 by %c15_i32 dim 1 : vector<48x256xf32>, i32 -> vector<48x256xf32>
    %42 = vector.extract_strided_slice %31 {offsets = [0, 2], sizes = [48, 1], strides = [1, 1]} : vector<48x9xf32> to vector<48x1xf32>
    %43 = vector.broadcast %42 : vector<48x1xf32> to vector<48x256xf32>
    %44 = arith.mulf %41, %43 : vector<48x256xf32>
    %45 = arith.addf %40, %44 : vector<48x256xf32>
    %c1_i32 = arith.constant 1 : i32
    %46 = tpu.dynamic_rotate %30 by %c1_i32 dim 1 : vector<48x256xf32>, i32 -> vector<48x256xf32>
    %47 = vector.extract_strided_slice %31 {offsets = [0, 3], sizes = [48, 1], strides = [1, 1]} : vector<48x9xf32> to vector<48x1xf32>
    %48 = vector.broadcast %47 : vector<48x1xf32> to vector<48x256xf32>
    %49 = arith.mulf %46, %48 : vector<48x256xf32>
    %50 = arith.addf %45, %49 : vector<48x256xf32>
    %51 = vector.extract_strided_slice %31 {offsets = [0, 4], sizes = [48, 1], strides = [1, 1]} : vector<48x9xf32> to vector<48x1xf32>
    %52 = vector.broadcast %51 : vector<48x1xf32> to vector<48x256xf32>
    %53 = arith.mulf %30, %52 : vector<48x256xf32>
    %54 = arith.addf %50, %53 : vector<48x256xf32>
    %c255_i32 = arith.constant 255 : i32
    %55 = tpu.dynamic_rotate %30 by %c255_i32 dim 1 : vector<48x256xf32>, i32 -> vector<48x256xf32>
    %56 = vector.extract_strided_slice %31 {offsets = [0, 5], sizes = [48, 1], strides = [1, 1]} : vector<48x9xf32> to vector<48x1xf32>
    %57 = vector.broadcast %56 : vector<48x1xf32> to vector<48x256xf32>
    %58 = arith.mulf %55, %57 : vector<48x256xf32>
    %59 = arith.addf %54, %58 : vector<48x256xf32>
    %c241_i32 = arith.constant 241 : i32
    %60 = tpu.dynamic_rotate %30 by %c241_i32 dim 1 : vector<48x256xf32>, i32 -> vector<48x256xf32>
    %61 = vector.extract_strided_slice %31 {offsets = [0, 6], sizes = [48, 1], strides = [1, 1]} : vector<48x9xf32> to vector<48x1xf32>
    %62 = vector.broadcast %61 : vector<48x1xf32> to vector<48x256xf32>
    %63 = arith.mulf %60, %62 : vector<48x256xf32>
    %64 = arith.addf %59, %63 : vector<48x256xf32>
    %c240_i32 = arith.constant 240 : i32
    %65 = tpu.dynamic_rotate %30 by %c240_i32 dim 1 : vector<48x256xf32>, i32 -> vector<48x256xf32>
    %66 = vector.extract_strided_slice %31 {offsets = [0, 7], sizes = [48, 1], strides = [1, 1]} : vector<48x9xf32> to vector<48x1xf32>
    %67 = vector.broadcast %66 : vector<48x1xf32> to vector<48x256xf32>
    %68 = arith.mulf %65, %67 : vector<48x256xf32>
    %69 = arith.addf %64, %68 : vector<48x256xf32>
    %c239_i32 = arith.constant 239 : i32
    %70 = tpu.dynamic_rotate %30 by %c239_i32 dim 1 : vector<48x256xf32>, i32 -> vector<48x256xf32>
    %71 = vector.extract_strided_slice %31 {offsets = [0, 8], sizes = [48, 1], strides = [1, 1]} : vector<48x9xf32> to vector<48x1xf32>
    %72 = vector.broadcast %71 : vector<48x1xf32> to vector<48x256xf32>
    %73 = arith.mulf %70, %72 : vector<48x256xf32>
    %74 = arith.addf %69, %73 : vector<48x256xf32>
    %c0_17 = arith.constant 0 : index
    %c0_18 = arith.constant 0 : index
    %75 = vector.load %arg6[%c0_17, %c0_18] : memref<48x256xf32, #tpu.memory_space<vmem>>, vector<48x256xf32>
    tpu.vector_store %arg6[%c0_17, %c0_18], %74 {strides = array<i32>} : memref<48x256xf32, #tpu.memory_space<vmem>>, vector<48x256xf32>,
    return
  }
}

</mosaic_0001>

<llo_original>
// kernel: fused_forward.1
$region0: #{fused_forward.1}
  #allocation0 [shape = 'u32[]', space=smem, size = 0x4, offset = 0x4, fixed_abs, tag = 'smem constant byte address 0x4 - core index']
  #allocation1 [shape = 'u32[144,128]{1,0:T(1,128)}', space=vmem, size = 0x12000, scoped, tag = 'internal scratch']
  %s0 = inlined_call_operand.vmem [shape: f32[48,256], index: 0, kind: input, shape index: {}]
  %s1 = inlined_call_operand.vmem [shape: f32[48,48], index: 1, kind: input, shape index: {}]
  %s2 = inlined_call_operand.vmem [shape: f32[48,1], index: 2, kind: input, shape index: {}]
  %s3 = inlined_call_operand.vmem [shape: f32[48,1], index: 3, kind: input, shape index: {}]
  %s4 = inlined_call_operand.vmem [shape: f32[48,9], index: 4, kind: input, shape index: {}]
  %s5 = inlined_call_operand.vmem [shape: f32[1,256], index: 5, kind: input, shape index: {}]
  %s6 = inlined_call_operand.vmem [shape: f32[48,256], index: 6, kind: output, shape index: {}]
  %s7 = sld [smem:[#allocation0]]
  $region34: #{fused_forward.1} parent=0
    _
  %s9 = ssub.s32 1, %s7
  %s10 = scalar_select 0, %s9, %s7
  // Predicated region
  $region2: #{fused_forward.1} parent=0 // pred_check
    _
  $region3: #{fused_forward.1} parent=0 // pred_check_branch
    %12 = sbr.rel (0) target = $region5
  $region4: #{fused_forward.1} parent=0 // pred_region
    _
  $region5: #{fused_forward.1} parent=0 // pred_fallthru
    _
  // Predicated region
  $region6: #{fused_forward.1} parent=0 // pred_check
    _
  $region7: #{fused_forward.1} parent=0 // pred_check_branch
    %14 = sbr.rel (0) target = $region9
  $region8: #{fused_forward.1} parent=0 // pred_region
    _
  $region9: #{fused_forward.1} parent=0 // pred_fallthru
    _
  // Predicated region
  $region10: #{fused_forward.1} parent=0 // pred_check
    _
  $region11: #{fused_forward.1} parent=0 // pred_check_branch
    %16 = sbr.rel (0) target = $region13
  $region12: #{fused_forward.1} parent=0 // pred_region
    _
  $region13: #{fused_forward.1} parent=0 // pred_fallthru
    _
  // Predicated region
  $region14: #{fused_forward.1} parent=0 // pred_check
    _
  $region15: #{fused_forward.1} parent=0 // pred_check_branch
    %18 = sbr.rel (0) target = $region17
  $region16: #{fused_forward.1} parent=0 // pred_region
    _
  $region17: #{fused_forward.1} parent=0 // pred_fallthru
    _
  // Predicated region
  $region18: #{fused_forward.1} parent=0 // pred_check
    _
  $region19: #{fused_forward.1} parent=0 // pred_check_branch
    %20 = sbr.rel (0) target = $region21
  $region20: #{fused_forward.1} parent=0 // pred_region
    _
  $region21: #{fused_forward.1} parent=0 // pred_fallthru
    _
  // Predicated region
  $region22: #{fused_forward.1} parent=0 // pred_check
    _
  $region23: #{fused_forward.1} parent=0 // pred_check_branch
    %22 = sbr.rel (0) target = $region25
  $region24: #{fused_forward.1} parent=0 // pred_region
    _
  $region25: #{fused_forward.1} parent=0 // pred_fallthru
    _
  %v23 = vld [vmem:[%s1] sm:$0xff]
  %v24 = vld [vmem:[%s1 + $0x8] sm:$0xff]
  %v25 = vld [vmem:[%s1 + $0x10] sm:$0xff]
  %v26 = vld [vmem:[%s1 + $0x18] sm:$0xff]
  %v27 = vld [vmem:[%s1 + $0x20] sm:$0xff]
  %v28 = vld [vmem:[%s1 + $0x28] sm:$0xff]
  %v29 = vld [vmem:[%s0] sm:$0xff]
  %v30 = vld [vmem:[%s0 + $0x8] sm:$0xff]
  %v31 = vld [vmem:[%s0 + $0x10] sm:$0xff]
  %v32 = vld [vmem:[%s0 + $0x18] sm:$0xff]
  %v33 = vld [vmem:[%s0 + $0x20] sm:$0xff]
  %v34 = vld [vmem:[%s0 + $0x28] sm:$0xff]
  %v35 = vld [vmem:[%s0 + $0x30] sm:$0xff]
  %v36 = vld [vmem:[%s0 + $0x38] sm:$0xff]
  %v37 = vld [vmem:[%s0 + $0x40] sm:$0xff]
  %v38 = vld [vmem:[%s0 + $0x48] sm:$0xff]
  %v39 = vld [vmem:[%s0 + $0x50] sm:$0xff]
  %v40 = vld [vmem:[%s0 + $0x58] sm:$0xff]
  %vm41 = vcmask 392192
  %v43 = vsel %vm41, %v23, 0
  %v46 = vsel %vm41, %v24, 0
  %v49 = vsel %vm41, %v25, 0
  %v52 = vsel %vm41, %v26, 0
  %v55 = vsel %vm41, %v27, 0
  %v58 = vsel %vm41, %v28, 0
  %60 = vmatprep.subr.mxu0 %v30
  %61 = vmatpush1.msra.mxu0 %v29
  %62 = vmatprep.subr.mxu0 %v32
  %63 = vmatpush1.msra.mxu0 %v31
  %64 = vmatprep.subr.mxu0 %v34
  %65 = vmatpush1.msra.mxu0 %v33
  %66 = vmatprep.subr.mxu0 %v36
  %67 = vmatpush1.msra.mxu0 %v35
  %68 = vmatprep.subr.mxu0 %v38
  %69 = vmatpush1.msra.mxu0 %v37
  %70 = vmatprep.subr.mxu0 %v40
  %71 = vmatpush1.msra.mxu0 %v39
  %72 = vmatprep.subr.mxu0 0.0
  %73 = vmatpush1.msra.mxu0 0.0
  %74 = vmatprep.subr.mxu0 0.0
  %75 = vmatpush1.msra.mxu0 0.0
  %76 = vmatprep.subr.mxu0 0.0
  %77 = vmatpush1.msra.mxu0 0.0
  %78 = vmatprep.subr.mxu0 0.0
  %79 = vmatpush1.msra.mxu0 0.0
  %80 = vmatprep.subr.mxu0 0.0
  %81 = vmatpush1.msra.mxu0 0.0
  %82 = vmatprep.subr.mxu0 0.0
  %83 = vmatpush1.msra.mxu0 0.0
  %84 = vmatprep.subr.mxu0 0.0
  %85 = vmatpush1.msra.mxu0 0.0
  %86 = vmatprep.subr.mxu0 0.0
  %87 = vmatpush1.msra.mxu0 0.0
  %88 = vmatprep.subr.mxu0 0.0
  %89 = vmatpush1.msra.mxu0 0.0
  %90 = vmatprep.subr.mxu0 0.0
  %91 = vmatpush1.msra.mxu0 0.0
  %92 = vmatprep.subr.mxu0 0.0
  %93 = vmatpush1.msra.mxu0 0.0
  %94 = vmatprep.subr.mxu0 0.0
  %95 = vmatpush1.msra.mxu0 0.0
  %96 = vmatprep.subr.mxu0 0.0
  %97 = vmatpush1.msra.mxu0 0.0
  %98 = vmatprep.subr.mxu0 0.0
  %99 = vmatpush1.msra.mxu0 0.0
  %100 = vmatprep.subr.mxu0 0.0
  %101 = vmatpush1.msra.mxu0 0.0
  %102 = vmatprep.subr.mxu0 0.0
  %103 = vmatpush1.msra.mxu0 0.0
  %104 = vmatprep.subr.mxu0 0.0
  %105 = vmatpush1.msra.mxu0 0.0
  %106 = vmatprep.subr.mxu0 0.0
  %107 = vmatpush1.msra.mxu0 0.0
  %108 = vmatprep.subr.mxu0 0.0
  %109 = vmatpush1.msra.mxu0 0.0
  %110 = vmatprep.subr.mxu0 0.0
  %111 = vmatpush1.msra.mxu0 0.0
  %112 = vmatprep.subr.mxu0 0.0
  %113 = vmatpush1.msra.mxu0 0.0
  %114 = vmatprep.subr.mxu0 0.0
  %115 = vmatpush1.msra.mxu0 0.0
  %116 = vmatprep.subr.mxu0 0.0
  %117 = vmatpush1.msra.mxu0 0.0
  %118 = vmatprep.subr.mxu0 0.0
  %119 = vmatpush1.msra.mxu0 0.0
  %120 = vmatprep.subr.mxu0 0.0
  %121 = vmatpush1.msra.mxu0 0.0
  %122 = vmatprep.subr.mxu0 0.0
  %123 = vmatpush1.msra.mxu0 0.0
  %124 = vmatprep.mubr.f32.mxu0 0.0
  %125 = vmatmul.mubr.f32.gmra.mrb[0].mxu0 %v43
  %v126 = vpop.f32.mrb[0].mxu0
  %v127 = vadd.f32 0.0, %v126
  %v128 = vpop.f32.mrb[0].mxu0
  %v129 = vadd.f32 0.0, %v128
  %130 = vmatprep.mubr.f32.mxu0 0.0
  %131 = vmatmul.mubr.f32.gmra.mrb[0].mxu0 %v46
  %v132 = vpop.f32.mrb[0].mxu0
  %v133 = vadd.f32 0.0, %v132
  %v134 = vpop.f32.mrb[0].mxu0
  %v135 = vadd.f32 0.0, %v134
  %136 = vmatprep.mubr.f32.mxu0 0.0
  %137 = vmatmul.mubr.f32.gmra.mrb[0].mxu0 %v49
  %v138 = vpop.f32.mrb[0].mxu0
  %v139 = vadd.f32 0.0, %v138
  %v140 = vpop.f32.mrb[0].mxu0
  %v141 = vadd.f32 0.0, %v140
  %142 = vmatprep.mubr.f32.mxu0 0.0
  %143 = vmatmul.mubr.f32.gmra.mrb[0].mxu0 %v52
  %v144 = vpop.f32.mrb[0].mxu0
  %v145 = vadd.f32 0.0, %v144
  %v146 = vpop.f32.mrb[0].mxu0
  %v147 = vadd.f32 0.0, %v146
  %148 = vmatprep.mubr.f32.mxu0 0.0
  %149 = vmatmul.mubr.f32.gmra.mrb[0].mxu0 %v55
  %v150 = vpop.f32.mrb[0].mxu0
  %v151 = vadd.f32 0.0, %v150
  %v152 = vpop.f32.mrb[0].mxu0
  %v153 = vadd.f32 0.0, %v152
  %154 = vmatprep.mubr.f32.mxu0 0.0
  %155 = vmatmul.mubr.f32.gmra.mrb[0].mxu0 %v58
  %v156 = vpop.f32.mrb[0].mxu0
  %v157 = vadd.f32 0.0, %v156
  %v158 = vpop.f32.mrb[0].mxu0
  %v159 = vadd.f32 0.0, %v158
  %160 = vdwg.mxu0
  %v161 = vadd.f32 %v127, %v129
  %162 = vadd.xlane.f32.xlu0 %v161
  %v163 = vpop.xlane.xlu0 %162
  %v164 = vadd.f32 %v133, %v135
  %165 = vadd.xlane.f32.xlu0 %v164
  %v166 = vpop.xlane.xlu0 %165
  %v167 = vadd.f32 %v139, %v141
  %168 = vadd.xlane.f32.xlu0 %v167
  %v169 = vpop.xlane.xlu0 %168
  %v170 = vadd.f32 %v145, %v147
  %171 = vadd.xlane.f32.xlu0 %v170
  %v172 = vpop.xlane.xlu0 %171
  %v173 = vadd.f32 %v151, %v153
  %174 = vadd.xlane.f32.xlu0 %v173
  %v175 = vpop.xlane.xlu0 %174
  %v176 = vadd.f32 %v157, %v159
  %177 = vadd.xlane.f32.xlu0 %v176
  %v178 = vpop.xlane.xlu0 %177
  %v179 = vmul.f32 %v163, 0.0051020407
  %v180 = vmul.f32 %v166, 0.0051020407
  %v181 = vmul.f32 %v169, 0.0051020407
  %v182 = vmul.f32 %v172, 0.0051020407
  %v183 = vmul.f32 %v175, 0.0051020407
  %v184 = vmul.f32 %v178, 0.0051020407
  %v185 = vmul.f32 %v127, %v127
  %v186 = vmul.f32 %v129, %v129
  %v187 = vmul.f32 %v133, %v133
  %v188 = vmul.f32 %v135, %v135
  %v189 = vmul.f32 %v139, %v139
  %v190 = vmul.f32 %v141, %v141
  %v191 = vmul.f32 %v145, %v145
  %v192 = vmul.f32 %v147, %v147
  %v193 = vmul.f32 %v151, %v151
  %v194 = vmul.f32 %v153, %v153
  %v195 = vmul.f32 %v157, %v157
  %v196 = vmul.f32 %v159, %v159
  %v197 = vadd.f32 %v185, %v186
  %198 = vadd.xlane.f32.xlu0 %v197
  %v199 = vpop.xlane.xlu0 %198
  %v200 = vadd.f32 %v187, %v188
  %201 = vadd.xlane.f32.xlu0 %v200
  %v202 = vpop.xlane.xlu0 %201
  %v203 = vadd.f32 %v189, %v190
  %204 = vadd.xlane.f32.xlu0 %v203
  %v205 = vpop.xlane.xlu0 %204
  %v206 = vadd.f32 %v191, %v192
  %207 = vadd.xlane.f32.xlu0 %v206
  %v208 = vpop.xlane.xlu0 %207
  %v209 = vadd.f32 %v193, %v194
  %210 = vadd.xlane.f32.xlu0 %v209
  %v211 = vpop.xlane.xlu0 %210
  %v212 = vadd.f32 %v195, %v196
  %213 = vadd.xlane.f32.xlu0 %v212
  %v214 = vpop.xlane.xlu0 %213
  %v215 = vmul.f32 %v199, 0.0051020407
  %v216 = vmul.f32 %v202, 0.0051020407
  %v217 = vmul.f32 %v205, 0.0051020407
  %v218 = vmul.f32 %v208, 0.0051020407
  %v219 = vmul.f32 %v211, 0.0051020407
  %v220 = vmul.f32 %v214, 0.0051020407
  %v221 = vmul.f32 %v179, %v179
  %v222 = vmul.f32 %v180, %v180
  %v223 = vmul.f32 %v181, %v181
  %v224 = vmul.f32 %v182, %v182
  %v225 = vmul.f32 %v183, %v183
  %v226 = vmul.f32 %v184, %v184
  %v227 = vsub.f32 %v215, %v221
  %v228 = vsub.f32 %v216, %v222
  %v229 = vsub.f32 %v217, %v223
  %v230 = vsub.f32 %v218, %v224
  %v231 = vsub.f32 %v219, %v225
  %v232 = vsub.f32 %v220, %v226
  %v233 = vld [vmem:[%s2] sm:$0xff]
  %v234 = vld [vmem:[%s2 + $0x8] sm:$0xff]
  %v235 = vld [vmem:[%s2 + $0x10] sm:$0xff]
  %v236 = vld [vmem:[%s2 + $0x18] sm:$0xff]
  %v237 = vld [vmem:[%s2 + $0x20] sm:$0xff]
  %v238 = vld [vmem:[%s2 + $0x28] sm:$0xff]
  %v239 = vadd.f32 %v227, 1e-05
  %v240 = vadd.f32 %v228, 1e-05
  %v241 = vadd.f32 %v229, 1e-05
  %v242 = vadd.f32 %v230, 1e-05
  %v243 = vadd.f32 %v231, 1e-05
  %v244 = vadd.f32 %v232, 1e-05
  %v245 = vrsqrt.pop %v239
  %v246 = vrsqrt.pop %v240
  %v247 = vrsqrt.pop %v241
  %v248 = vrsqrt.pop %v242
  %v249 = vrsqrt.pop %v243
  %v250 = vrsqrt.pop %v244
  %v251 = vmul.f32 %v233, %v245
  %v252 = vmul.f32 %v234, %v246
  %v253 = vmul.f32 %v235, %v247
  %v254 = vmul.f32 %v236, %v248
  %v255 = vmul.f32 %v237, %v249
  %v256 = vmul.f32 %v238, %v250
  %v257 = vld [vmem:[%s3] sm:$0xff]
  %v258 = vld [vmem:[%s3 + $0x8] sm:$0xff]
  %v259 = vld [vmem:[%s3 + $0x10] sm:$0xff]
  %v260 = vld [vmem:[%s3 + $0x18] sm:$0xff]
  %v261 = vld [vmem:[%s3 + $0x20] sm:$0xff]
  %v262 = vld [vmem:[%s3 + $0x28] sm:$0xff]
  %v263 = vmul.f32 %v179, %v251
  %v264 = vmul.f32 %v180, %v252
  %v265 = vmul.f32 %v181, %v253
  %v266 = vmul.f32 %v182, %v254
  %v267 = vmul.f32 %v183, %v255
  %v268 = vmul.f32 %v184, %v256
  %v269 = vsub.f32 %v257, %v263
  %v270 = vsub.f32 %v258, %v264
  %v271 = vsub.f32 %v259, %v265
  %v272 = vsub.f32 %v260, %v266
  %v273 = vsub.f32 %v261, %v267
  %v274 = vsub.f32 %v262, %v268
  %276 = vset.pattern.permute.xlu0 0
  %277 = vperm.xlu0 %276, %v251
  %v278 = vpop.permute.xlu0 %277
  %281 = vset.pattern.permute.xlu0 0
  %282 = vperm.xlu0 %281, %v252
  %v283 = vpop.permute.xlu0 %282
  %286 = vset.pattern.permute.xlu0 0
  %287 = vperm.xlu0 %286, %v253
  %v288 = vpop.permute.xlu0 %287
  %291 = vset.pattern.permute.xlu0 0
  %292 = vperm.xlu0 %291, %v254
  %v293 = vpop.permute.xlu0 %292
  %296 = vset.pattern.permute.xlu0 0
  %297 = vperm.xlu0 %296, %v255
  %v298 = vpop.permute.xlu0 %297
  %301 = vset.pattern.permute.xlu0 0
  %302 = vperm.xlu0 %301, %v256
  %v303 = vpop.permute.xlu0 %302
  %v305 = vmul.f32 %v127, %v278
  %v306 = vmul.f32 %v129, %v278
  %v307 = vmul.f32 %v133, %v283
  %v308 = vmul.f32 %v135, %v283
  %v309 = vmul.f32 %v139, %v288
  %v310 = vmul.f32 %v141, %v288
  %v311 = vmul.f32 %v145, %v293
  %v312 = vmul.f32 %v147, %v293
  %v313 = vmul.f32 %v151, %v298
  %v314 = vmul.f32 %v153, %v298
  %v315 = vmul.f32 %v157, %v303
  %v316 = vmul.f32 %v159, %v303
  %318 = vset.pattern.permute.xlu0 0
  %319 = vperm.xlu0 %318, %v269
  %v320 = vpop.permute.xlu0 %319
  %323 = vset.pattern.permute.xlu0 0
  %324 = vperm.xlu0 %323, %v270
  %v325 = vpop.permute.xlu0 %324
  %328 = vset.pattern.permute.xlu0 0
  %329 = vperm.xlu0 %328, %v271
  %v330 = vpop.permute.xlu0 %329
  %333 = vset.pattern.permute.xlu0 0
  %334 = vperm.xlu0 %333, %v272
  %v335 = vpop.permute.xlu0 %334
  %338 = vset.pattern.permute.xlu0 0
  %339 = vperm.xlu0 %338, %v273
  %v340 = vpop.permute.xlu0 %339
  %343 = vset.pattern.permute.xlu0 0
  %344 = vperm.xlu0 %343, %v274
  %v345 = vpop.permute.xlu0 %344
  %v347 = vadd.f32 %v305, %v320
  %v348 = vadd.f32 %v306, %v320
  %v349 = vadd.f32 %v307, %v325
  %v350 = vadd.f32 %v308, %v325
  %v351 = vadd.f32 %v309, %v330
  %v352 = vadd.f32 %v310, %v330
  %v353 = vadd.f32 %v311, %v335
  %v354 = vadd.f32 %v312, %v335
  %v355 = vadd.f32 %v313, %v340
  %v356 = vadd.f32 %v314, %v340
  %v357 = vadd.f32 %v315, %v345
  %v358 = vadd.f32 %v316, %v345
  %v359 = vmax.f32 %v347, 0.0
  %v360 = vmax.f32 %v348, 0.0
  %v361 = vmax.f32 %v349, 0.0
  %v362 = vmax.f32 %v350, 0.0
  %v363 = vmax.f32 %v351, 0.0
  %v364 = vmax.f32 %v352, 0.0
  %v365 = vmax.f32 %v353, 0.0
  %v366 = vmax.f32 %v354, 0.0
  %v367 = vmax.f32 %v355, 0.0
  %v368 = vmax.f32 %v356, 0.0
  %v369 = vmax.f32 %v357, 0.0
  %v370 = vmax.f32 %v358, 0.0
  %v371 = vld [vmem:[%s5] sm:$0x3]
  %v373 = vlaneseq
  %v374 = vshrl.u32 %v373, 7
  %v375 = vsub.s32 0, %v374
  %v376 = vrot.slane %v371, %v375
  %v377 = vlaneseq
  %v378 = vshrl.u32 %v377, 7
  %v379 = vsub.s32 1, %v378
  %v380 = vrot.slane %v371, %v379
  %v383 = vmul.f32 %v359, %v376
  %v384 = vmul.f32 %v360, %v380
  %v385 = vmul.f32 %v361, %v376
  %v386 = vmul.f32 %v362, %v380
  %v387 = vmul.f32 %v363, %v376
  %v388 = vmul.f32 %v364, %v380
  %v389 = vmul.f32 %v365, %v376
  %v390 = vmul.f32 %v366, %v380
  %v391 = vmul.f32 %v367, %v376
  %v392 = vmul.f32 %v368, %v380
  %v393 = vmul.f32 %v369, %v376
  %v394 = vmul.f32 %v370, %v380
  %v395 = vld [vmem:[%s4] sm:$0xff]
  %v396 = vld [vmem:[%s4 + $0x8] sm:$0xff]
  %v397 = vld [vmem:[%s4 + $0x10] sm:$0xff]
  %v398 = vld [vmem:[%s4 + $0x18] sm:$0xff]
  %v399 = vld [vmem:[%s4 + $0x20] sm:$0xff]
  %v400 = vld [vmem:[%s4 + $0x28] sm:$0xff]
  %401 = vrot.lane.b32.xlu0 %v383, 17
  %v402 = vpop.permute.xlu0 %401
  %403 = vrot.lane.b32.xlu0 %v385, 17
  %v404 = vpop.permute.xlu0 %403
  %405 = vrot.lane.b32.xlu0 %v387, 17
  %v406 = vpop.permute.xlu0 %405
  %407 = vrot.lane.b32.xlu0 %v389, 17
  %v408 = vpop.permute.xlu0 %407
  %409 = vrot.lane.b32.xlu0 %v391, 17
  %v410 = vpop.permute.xlu0 %409
  %411 = vrot.lane.b32.xlu0 %v393, 17
  %v412 = vpop.permute.xlu0 %411
  %413 = vrot.lane.b32.xlu0 %v384, 17
  %v414 = vpop.permute.xlu0 %413
  %415 = vrot.lane.b32.xlu0 %v386, 17
  %v416 = vpop.permute.xlu0 %415
  %417 = vrot.lane.b32.xlu0 %v388, 17
  %v418 = vpop.permute.xlu0 %417
  %419 = vrot.lane.b32.xlu0 %v390, 17
  %v420 = vpop.permute.xlu0 %419
  %421 = vrot.lane.b32.xlu0 %v392, 17
  %v422 = vpop.permute.xlu0 %421
  %423 = vrot.lane.b32.xlu0 %v394, 17
  %v424 = vpop.permute.xlu0 %423
  %v425 = vlaneseq
  %v426 = vand.u32 %v425, 127
  %vm427 = vcmp.lt.s32.totalorder %v426, 17
  %v428 = vsel %vm427, %v402, %v414
  %v429 = vsel %vm427, %v404, %v416
  %v430 = vsel %vm427, %v406, %v418
  %v431 = vsel %vm427, %v408, %v420
  %v432 = vsel %vm427, %v410, %v422
  %v433 = vsel %vm427, %v412, %v424
  %v434 = vsel %vm427, %v414, %v402
  %v435 = vsel %vm427, %v416, %v404
  %v436 = vsel %vm427, %v418, %v406
  %v437 = vsel %vm427, %v420, %v408
  %v438 = vsel %vm427, %v422, %v410
  %v439 = vsel %vm427, %v424, %v412
  %441 = vset.pattern.permute.xlu0 0
  %442 = vperm.xlu0 %441, %v395
  %v443 = vpop.permute.xlu0 %442
  %446 = vset.pattern.permute.xlu0 0
  %447 = vperm.xlu0 %446, %v396
  %v448 = vpop.permute.xlu0 %447
  %451 = vset.pattern.permute.xlu0 0
  %452 = vperm.xlu0 %451, %v397
  %v453 = vpop.permute.xlu0 %452
  %456 = vset.pattern.permute.xlu0 0
  %457 = vperm.xlu0 %456, %v398
  %v458 = vpop.permute.xlu0 %457
  %461 = vset.pattern.permute.xlu0 0
  %462 = vperm.xlu0 %461, %v399
  %v463 = vpop.permute.xlu0 %462
  %466 = vset.pattern.permute.xlu0 0
  %467 = vperm.xlu0 %466, %v400
  %v468 = vpop.permute.xlu0 %467
  %v470 = vmul.f32 %v434, %v443
  %v471 = vmul.f32 %v428, %v443
  %v472 = vmul.f32 %v435, %v448
  %v473 = vmul.f32 %v429, %v448
  %v474 = vmul.f32 %v436, %v453
  %v475 = vmul.f32 %v430, %v453
  %v476 = vmul.f32 %v437, %v458
  %v477 = vmul.f32 %v431, %v458
  %v478 = vmul.f32 %v438, %v463
  %v479 = vmul.f32 %v432, %v463
  %v480 = vmul.f32 %v439, %v468
  %v481 = vmul.f32 %v433, %v468
  %482 = vrot.lane.b32.xlu0 %v383, 16
  %v483 = vpop.permute.xlu0 %482
  %484 = vrot.lane.b32.xlu0 %v385, 16
  %v485 = vpop.permute.xlu0 %484
  %486 = vrot.lane.b32.xlu0 %v387, 16
  %v487 = vpop.permute.xlu0 %486
  %488 = vrot.lane.b32.xlu0 %v389, 16
  %v489 = vpop.permute.xlu0 %488
  %490 = vrot.lane.b32.xlu0 %v391, 16
  %v491 = vpop.permute.xlu0 %490
  %492 = vrot.lane.b32.xlu0 %v393, 16
  %v493 = vpop.permute.xlu0 %492
  %494 = vrot.lane.b32.xlu0 %v384, 16
  %v495 = vpop.permute.xlu0 %494
  %496 = vrot.lane.b32.xlu0 %v386, 16
  %v497 = vpop.permute.xlu0 %496
  %498 = vrot.lane.b32.xlu0 %v388, 16
  %v499 = vpop.permute.xlu0 %498
  %500 = vrot.lane.b32.xlu0 %v390, 16
  %v501 = vpop.permute.xlu0 %500
  %502 = vrot.lane.b32.xlu0 %v392, 16
  %v503 = vpop.permute.xlu0 %502
  %504 = vrot.lane.b32.xlu0 %v394, 16
  %v505 = vpop.permute.xlu0 %504
  %vm506 = vcmp.lt.s32.totalorder %v426, 16
  %v507 = vsel %vm506, %v483, %v495
  %v508 = vsel %vm506, %v485, %v497
  %v509 = vsel %vm506, %v487, %v499
  %v510 = vsel %vm506, %v489, %v501
  %v511 = vsel %vm506, %v491, %v503
  %v512 = vsel %vm506, %v493, %v505
  %v513 = vsel %vm506, %v495, %v483
  %v514 = vsel %vm506, %v497, %v485
  %v515 = vsel %vm506, %v499, %v487
  %v516 = vsel %vm506, %v501, %v489
  %v517 = vsel %vm506, %v503, %v491
  %v518 = vsel %vm506, %v505, %v493
  %519 = vset.pattern.permute.xlu0 1
  %520 = vperm.xlu0 %519, %v395
  %v521 = vpop.permute.xlu0 %520
  %523 = vset.pattern.permute.xlu0 1
  %524 = vperm.xlu0 %523, %v396
  %v525 = vpop.permute.xlu0 %524
  %527 = vset.pattern.permute.xlu0 1
  %528 = vperm.xlu0 %527, %v397
  %v529 = vpop.permute.xlu0 %528
  %531 = vset.pattern.permute.xlu0 1
  %532 = vperm.xlu0 %531, %v398
  %v533 = vpop.permute.xlu0 %532
  %535 = vset.pattern.permute.xlu0 1
  %536 = vperm.xlu0 %535, %v399
  %v537 = vpop.permute.xlu0 %536
  %539 = vset.pattern.permute.xlu0 1
  %540 = vperm.xlu0 %539, %v400
  %v541 = vpop.permute.xlu0 %540
  %v543 = vmul.f32 %v513, %v521
  %v544 = vmul.f32 %v507, %v521
  %v545 = vmul.f32 %v514, %v525
  %v546 = vmul.f32 %v508, %v525
  %v547 = vmul.f32 %v515, %v529
  %v548 = vmul.f32 %v509, %v529
  %v549 = vmul.f32 %v516, %v533
  %v550 = vmul.f32 %v510, %v533
  %v551 = vmul.f32 %v517, %v537
  %v552 = vmul.f32 %v511, %v537
  %v553 = vmul.f32 %v518, %v541
  %v554 = vmul.f32 %v512, %v541
  %v555 = vadd.f32 %v470, %v543
  %v556 = vadd.f32 %v471, %v544
  %v557 = vadd.f32 %v472, %v545
  %v558 = vadd.f32 %v473, %v546
  %v559 = vadd.f32 %v474, %v547
  %v560 = vadd.f32 %v475, %v548
  %v561 = vadd.f32 %v476, %v549
  %v562 = vadd.f32 %v477, %v550
  %v563 = vadd.f32 %v478, %v551
  %v564 = vadd.f32 %v479, %v552
  %v565 = vadd.f32 %v480, %v553
  %v566 = vadd.f32 %v481, %v554
  %567 = vrot.lane.b32.xlu0 %v383, 15
  %v568 = vpop.permute.xlu0 %567
  %569 = vrot.lane.b32.xlu0 %v385, 15
  %v570 = vpop.permute.xlu0 %569
  %571 = vrot.lane.b32.xlu0 %v387, 15
  %v572 = vpop.permute.xlu0 %571
  %573 = vrot.lane.b32.xlu0 %v389, 15
  %v574 = vpop.permute.xlu0 %573
  %575 = vrot.lane.b32.xlu0 %v391, 15
  %v576 = vpop.permute.xlu0 %575
  %577 = vrot.lane.b32.xlu0 %v393, 15
  %v578 = vpop.permute.xlu0 %577
  %579 = vrot.lane.b32.xlu0 %v384, 15
  %v580 = vpop.permute.xlu0 %579
  %581 = vrot.lane.b32.xlu0 %v386, 15
  %v582 = vpop.permute.xlu0 %581
  %583 = vrot.lane.b32.xlu0 %v388, 15
  %v584 = vpop.permute.xlu0 %583
  %585 = vrot.lane.b32.xlu0 %v390, 15
  %v586 = vpop.permute.xlu0 %585
  %587 = vrot.lane.b32.xlu0 %v392, 15
  %v588 = vpop.permute.xlu0 %587
  %589 = vrot.lane.b32.xlu0 %v394, 15
  %v590 = vpop.permute.xlu0 %589
  %vm591 = vcmp.lt.s32.totalorder %v426, 15
  %v592 = vsel %vm591, %v568, %v580
  %v593 = vsel %vm591, %v570, %v582
  %v594 = vsel %vm591, %v572, %v584
  %v595 = vsel %vm591, %v574, %v586
  %v596 = vsel %vm591, %v576, %v588
  %v597 = vsel %vm591, %v578, %v590
  %v598 = vsel %vm591, %v580, %v568
  %v599 = vsel %vm591, %v582, %v570
  %v600 = vsel %vm591, %v584, %v572
  %v601 = vsel %vm591, %v586, %v574
  %v602 = vsel %vm591, %v588, %v576
  %v603 = vsel %vm591, %v590, %v578
  %604 = vset.pattern.permute.xlu0 2
  %605 = vperm.xlu0 %604, %v395
  %v606 = vpop.permute.xlu0 %605
  %608 = vset.pattern.permute.xlu0 2
  %609 = vperm.xlu0 %608, %v396
  %v610 = vpop.permute.xlu0 %609
  %612 = vset.pattern.permute.xlu0 2
  %613 = vperm.xlu0 %612, %v397
  %v614 = vpop.permute.xlu0 %613
  %616 = vset.pattern.permute.xlu0 2
  %617 = vperm.xlu0 %616, %v398
  %v618 = vpop.permute.xlu0 %617
  %620 = vset.pattern.permute.xlu0 2
  %621 = vperm.xlu0 %620, %v399
  %v622 = vpop.permute.xlu0 %621
  %624 = vset.pattern.permute.xlu0 2
  %625 = vperm.xlu0 %624, %v400
  %v626 = vpop.permute.xlu0 %625
  %v628 = vmul.f32 %v598, %v606
  %v629 = vmul.f32 %v592, %v606
  %v630 = vmul.f32 %v599, %v610
  %v631 = vmul.f32 %v593, %v610
  %v632 = vmul.f32 %v600, %v614
  %v633 = vmul.f32 %v594, %v614
  %v634 = vmul.f32 %v601, %v618
  %v635 = vmul.f32 %v595, %v618
  %v636 = vmul.f32 %v602, %v622
  %v637 = vmul.f32 %v596, %v622
  %v638 = vmul.f32 %v603, %v626
  %v639 = vmul.f32 %v597, %v626
  %v640 = vadd.f32 %v555, %v628
  %v641 = vadd.f32 %v556, %v629
  %v642 = vadd.f32 %v557, %v630
  %v643 = vadd.f32 %v558, %v631
  %v644 = vadd.f32 %v559, %v632
  %v645 = vadd.f32 %v560, %v633
  %v646 = vadd.f32 %v561, %v634
  %v647 = vadd.f32 %v562, %v635
  %v648 = vadd.f32 %v563, %v636
  %v649 = vadd.f32 %v564, %v637
  %v650 = vadd.f32 %v565, %v638
  %v651 = vadd.f32 %v566, %v639
  %652 = vrot.lane.b32.xlu0 %v383, 1
  %v653 = vpop.permute.xlu0 %652
  %654 = vrot.lane.b32.xlu0 %v385, 1
  %v655 = vpop.permute.xlu0 %654
  %656 = vrot.lane.b32.xlu0 %v387, 1
  %v657 = vpop.permute.xlu0 %656
  %658 = vrot.lane.b32.xlu0 %v389, 1
  %v659 = vpop.permute.xlu0 %658
  %660 = vrot.lane.b32.xlu0 %v391, 1
  %v661 = vpop.permute.xlu0 %660
  %662 = vrot.lane.b32.xlu0 %v393, 1
  %v663 = vpop.permute.xlu0 %662
  %664 = vrot.lane.b32.xlu0 %v384, 1
  %v665 = vpop.permute.xlu0 %664
  %666 = vrot.lane.b32.xlu0 %v386, 1
  %v667 = vpop.permute.xlu0 %666
  %668 = vrot.lane.b32.xlu0 %v388, 1
  %v669 = vpop.permute.xlu0 %668
  %670 = vrot.lane.b32.xlu0 %v390, 1
  %v671 = vpop.permute.xlu0 %670
  %672 = vrot.lane.b32.xlu0 %v392, 1
  %v673 = vpop.permute.xlu0 %672
  %674 = vrot.lane.b32.xlu0 %v394, 1
  %v675 = vpop.permute.xlu0 %674
  %vm676 = vcmp.lt.s32.totalorder %v426, 1
  %v677 = vsel %vm676, %v653, %v665
  %v678 = vsel %vm676, %v655, %v667
  %v679 = vsel %vm676, %v657, %v669
  %v680 = vsel %vm676, %v659, %v671
  %v681 = vsel %vm676, %v661, %v673
  %v682 = vsel %vm676, %v663, %v675
  %v683 = vsel %vm676, %v665, %v653
  %v684 = vsel %vm676, %v667, %v655
  %v685 = vsel %vm676, %v669, %v657
  %v686 = vsel %vm676, %v671, %v659
  %v687 = vsel %vm676, %v673, %v661
  %v688 = vsel %vm676, %v675, %v663
  %689 = vset.pattern.permute.xlu0 3
  %690 = vperm.xlu0 %689, %v395
  %v691 = vpop.permute.xlu0 %690
  %693 = vset.pattern.permute.xlu0 3
  %694 = vperm.xlu0 %693, %v396
  %v695 = vpop.permute.xlu0 %694
  %697 = vset.pattern.permute.xlu0 3
  %698 = vperm.xlu0 %697, %v397
  %v699 = vpop.permute.xlu0 %698
  %701 = vset.pattern.permute.xlu0 3
  %702 = vperm.xlu0 %701, %v398
  %v703 = vpop.permute.xlu0 %702
  %705 = vset.pattern.permute.xlu0 3
  %706 = vperm.xlu0 %705, %v399
  %v707 = vpop.permute.xlu0 %706
  %709 = vset.pattern.permute.xlu0 3
  %710 = vperm.xlu0 %709, %v400
  %v711 = vpop.permute.xlu0 %710
  %v713 = vmul.f32 %v683, %v691
  %v714 = vmul.f32 %v677, %v691
  %v715 = vmul.f32 %v684, %v695
  %v716 = vmul.f32 %v678, %v695
  %v717 = vmul.f32 %v685, %v699
  %v718 = vmul.f32 %v679, %v699
  %v719 = vmul.f32 %v686, %v703
  %v720 = vmul.f32 %v680, %v703
  %v721 = vmul.f32 %v687, %v707
  %v722 = vmul.f32 %v681, %v707
  %v723 = vmul.f32 %v688, %v711
  %v724 = vmul.f32 %v682, %v711
  %v725 = vadd.f32 %v640, %v713
  %v726 = vadd.f32 %v641, %v714
  %v727 = vadd.f32 %v642, %v715
  %v728 = vadd.f32 %v643, %v716
  %v729 = vadd.f32 %v644, %v717
  %v730 = vadd.f32 %v645, %v718
  %v731 = vadd.f32 %v646, %v719
  %v732 = vadd.f32 %v647, %v720
  %v733 = vadd.f32 %v648, %v721
  %v734 = vadd.f32 %v649, %v722
  %v735 = vadd.f32 %v650, %v723
  %v736 = vadd.f32 %v651, %v724
  %737 = vset.pattern.permute.xlu0 4
  %738 = vperm.xlu0 %737, %v395
  %v739 = vpop.permute.xlu0 %738
  %741 = vset.pattern.permute.xlu0 4
  %742 = vperm.xlu0 %741, %v396
  %v743 = vpop.permute.xlu0 %742
  %745 = vset.pattern.permute.xlu0 4
  %746 = vperm.xlu0 %745, %v397
  %v747 = vpop.permute.xlu0 %746
  %749 = vset.pattern.permute.xlu0 4
  %750 = vperm.xlu0 %749, %v398
  %v751 = vpop.permute.xlu0 %750
  %753 = vset.pattern.permute.xlu0 4
  %754 = vperm.xlu0 %753, %v399
  %v755 = vpop.permute.xlu0 %754
  %757 = vset.pattern.permute.xlu0 4
  %758 = vperm.xlu0 %757, %v400
  %v759 = vpop.permute.xlu0 %758
  %v761 = vmul.f32 %v383, %v739
  %v762 = vmul.f32 %v384, %v739
  %v763 = vmul.f32 %v385, %v743
  %v764 = vmul.f32 %v386, %v743
  %v765 = vmul.f32 %v387, %v747
  %v766 = vmul.f32 %v388, %v747
  %v767 = vmul.f32 %v389, %v751
  %v768 = vmul.f32 %v390, %v751
  %v769 = vmul.f32 %v391, %v755
  %v770 = vmul.f32 %v392, %v755
  %v771 = vmul.f32 %v393, %v759
  %v772 = vmul.f32 %v394, %v759
  %v773 = vadd.f32 %v725, %v761
  %v774 = vadd.f32 %v726, %v762
  %v775 = vadd.f32 %v727, %v763
  %v776 = vadd.f32 %v728, %v764
  %v777 = vadd.f32 %v729, %v765
  %v778 = vadd.f32 %v730, %v766
  %v779 = vadd.f32 %v731, %v767
  %v780 = vadd.f32 %v732, %v768
  %v781 = vadd.f32 %v733, %v769
  %v782 = vadd.f32 %v734, %v770
  %v783 = vadd.f32 %v735, %v771
  %v784 = vadd.f32 %v736, %v772
  %785 = vrot.lane.b32.xlu0 %v383, 127
  %v786 = vpop.permute.xlu0 %785
  %787 = vrot.lane.b32.xlu0 %v385, 127
  %v788 = vpop.permute.xlu0 %787
  %789 = vrot.lane.b32.xlu0 %v387, 127
  %v790 = vpop.permute.xlu0 %789
  %791 = vrot.lane.b32.xlu0 %v389, 127
  %v792 = vpop.permute.xlu0 %791
  %793 = vrot.lane.b32.xlu0 %v391, 127
  %v794 = vpop.permute.xlu0 %793
  %795 = vrot.lane.b32.xlu0 %v393, 127
  %v796 = vpop.permute.xlu0 %795
  %797 = vrot.lane.b32.xlu0 %v384, 127
  %v798 = vpop.permute.xlu0 %797
  %799 = vrot.lane.b32.xlu0 %v386, 127
  %v800 = vpop.permute.xlu0 %799
  %801 = vrot.lane.b32.xlu0 %v388, 127
  %v802 = vpop.permute.xlu0 %801
  %803 = vrot.lane.b32.xlu0 %v390, 127
  %v804 = vpop.permute.xlu0 %803
  %805 = vrot.lane.b32.xlu0 %v392, 127
  %v806 = vpop.permute.xlu0 %805
  %807 = vrot.lane.b32.xlu0 %v394, 127
  %v808 = vpop.permute.xlu0 %807
  %vm809 = vcmp.lt.s32.totalorder %v426, 127
  %v810 = vsel %vm809, %v786, %v798
  %v811 = vsel %vm809, %v788, %v800
  %v812 = vsel %vm809, %v790, %v802
  %v813 = vsel %vm809, %v792, %v804
  %v814 = vsel %vm809, %v794, %v806
  %v815 = vsel %vm809, %v796, %v808
  %v816 = vsel %vm809, %v798, %v786
  %v817 = vsel %vm809, %v800, %v788
  %v818 = vsel %vm809, %v802, %v790
  %v819 = vsel %vm809, %v804, %v792
  %v820 = vsel %vm809, %v806, %v794
  %v821 = vsel %vm809, %v808, %v796
  %822 = vset.pattern.permute.xlu0 5
  %823 = vperm.xlu0 %822, %v395
  %v824 = vpop.permute.xlu0 %823
  %826 = vset.pattern.permute.xlu0 5
  %827 = vperm.xlu0 %826, %v396
  %v828 = vpop.permute.xlu0 %827
  %830 = vset.pattern.permute.xlu0 5
  %831 = vperm.xlu0 %830, %v397
  %v832 = vpop.permute.xlu0 %831
  %834 = vset.pattern.permute.xlu0 5
  %835 = vperm.xlu0 %834, %v398
  %v836 = vpop.permute.xlu0 %835
  %838 = vset.pattern.permute.xlu0 5
  %839 = vperm.xlu0 %838, %v399
  %v840 = vpop.permute.xlu0 %839
  %842 = vset.pattern.permute.xlu0 5
  %843 = vperm.xlu0 %842, %v400
  %v844 = vpop.permute.xlu0 %843
  %v846 = vmul.f32 %v810, %v824
  %v847 = vmul.f32 %v816, %v824
  %v848 = vmul.f32 %v811, %v828
  %v849 = vmul.f32 %v817, %v828
  %v850 = vmul.f32 %v812, %v832
  %v851 = vmul.f32 %v818, %v832
  %v852 = vmul.f32 %v813, %v836
  %v853 = vmul.f32 %v819, %v836
  %v854 = vmul.f32 %v814, %v840
  %v855 = vmul.f32 %v820, %v840
  %v856 = vmul.f32 %v815, %v844
  %v857 = vmul.f32 %v821, %v844
  %v858 = vadd.f32 %v773, %v846
  %v859 = vadd.f32 %v774, %v847
  %v860 = vadd.f32 %v775, %v848
  %v861 = vadd.f32 %v776, %v849
  %v862 = vadd.f32 %v777, %v850
  %v863 = vadd.f32 %v778, %v851
  %v864 = vadd.f32 %v779, %v852
  %v865 = vadd.f32 %v780, %v853
  %v866 = vadd.f32 %v781, %v854
  %v867 = vadd.f32 %v782, %v855
  %v868 = vadd.f32 %v783, %v856
  %v869 = vadd.f32 %v784, %v857
  %870 = vrot.lane.b32.xlu0 %v383, 113
  %v871 = vpop.permute.xlu0 %870
  %872 = vrot.lane.b32.xlu0 %v385, 113
  %v873 = vpop.permute.xlu0 %872
  %874 = vrot.lane.b32.xlu0 %v387, 113
  %v875 = vpop.permute.xlu0 %874
  %876 = vrot.lane.b32.xlu0 %v389, 113
  %v877 = vpop.permute.xlu0 %876
  %878 = vrot.lane.b32.xlu0 %v391, 113
  %v879 = vpop.permute.xlu0 %878
  %880 = vrot.lane.b32.xlu0 %v393, 113
  %v881 = vpop.permute.xlu0 %880
  %882 = vrot.lane.b32.xlu0 %v384, 113
  %v883 = vpop.permute.xlu0 %882
  %884 = vrot.lane.b32.xlu0 %v386, 113
  %v885 = vpop.permute.xlu0 %884
  %886 = vrot.lane.b32.xlu0 %v388, 113
  %v887 = vpop.permute.xlu0 %886
  %888 = vrot.lane.b32.xlu0 %v390, 113
  %v889 = vpop.permute.xlu0 %888
  %890 = vrot.lane.b32.xlu0 %v392, 113
  %v891 = vpop.permute.xlu0 %890
  %892 = vrot.lane.b32.xlu0 %v394, 113
  %v893 = vpop.permute.xlu0 %892
  %vm894 = vcmp.lt.s32.totalorder %v426, 113
  %v895 = vsel %vm894, %v871, %v883
  %v896 = vsel %vm894, %v873, %v885
  %v897 = vsel %vm894, %v875, %v887
  %v898 = vsel %vm894, %v877, %v889
  %v899 = vsel %vm894, %v879, %v891
  %v900 = vsel %vm894, %v881, %v893
  %v901 = vsel %vm894, %v883, %v871
  %v902 = vsel %vm894, %v885, %v873
  %v903 = vsel %vm894, %v887, %v875
  %v904 = vsel %vm894, %v889, %v877
  %v905 = vsel %vm894, %v891, %v879
  %v906 = vsel %vm894, %v893, %v881
  %907 = vset.pattern.permute.xlu0 6
  %908 = vperm.xlu0 %907, %v395
  %v909 = vpop.permute.xlu0 %908
  %911 = vset.pattern.permute.xlu0 6
  %912 = vperm.xlu0 %911, %v396
  %v913 = vpop.permute.xlu0 %912
  %915 = vset.pattern.permute.xlu0 6
  %916 = vperm.xlu0 %915, %v397
  %v917 = vpop.permute.xlu0 %916
  %919 = vset.pattern.permute.xlu0 6
  %920 = vperm.xlu0 %919, %v398
  %v921 = vpop.permute.xlu0 %920
  %923 = vset.pattern.permute.xlu0 6
  %924 = vperm.xlu0 %923, %v399
  %v925 = vpop.permute.xlu0 %924
  %927 = vset.pattern.permute.xlu0 6
  %928 = vperm.xlu0 %927, %v400
  %v929 = vpop.permute.xlu0 %928
  %v931 = vmul.f32 %v895, %v909
  %v932 = vmul.f32 %v901, %v909
  %v933 = vmul.f32 %v896, %v913
  %v934 = vmul.f32 %v902, %v913
  %v935 = vmul.f32 %v897, %v917
  %v936 = vmul.f32 %v903, %v917
  %v937 = vmul.f32 %v898, %v921
  %v938 = vmul.f32 %v904, %v921
  %v939 = vmul.f32 %v899, %v925
  %v940 = vmul.f32 %v905, %v925
  %v941 = vmul.f32 %v900, %v929
  %v942 = vmul.f32 %v906, %v929
  %v943 = vadd.f32 %v858, %v931
  %v944 = vadd.f32 %v859, %v932
  %v945 = vadd.f32 %v860, %v933
  %v946 = vadd.f32 %v861, %v934
  %v947 = vadd.f32 %v862, %v935
  %v948 = vadd.f32 %v863, %v936
  %v949 = vadd.f32 %v864, %v937
  %v950 = vadd.f32 %v865, %v938
  %v951 = vadd.f32 %v866, %v939
  %v952 = vadd.f32 %v867, %v940
  %v953 = vadd.f32 %v868, %v941
  %v954 = vadd.f32 %v869, %v942
  %955 = vrot.lane.b32.xlu0 %v383, 112
  %v956 = vpop.permute.xlu0 %955
  %957 = vrot.lane.b32.xlu0 %v385, 112
  %v958 = vpop.permute.xlu0 %957
  %959 = vrot.lane.b32.xlu0 %v387, 112
  %v960 = vpop.permute.xlu0 %959
  %961 = vrot.lane.b32.xlu0 %v389, 112
  %v962 = vpop.permute.xlu0 %961
  %963 = vrot.lane.b32.xlu0 %v391, 112
  %v964 = vpop.permute.xlu0 %963
  %965 = vrot.lane.b32.xlu0 %v393, 112
  %v966 = vpop.permute.xlu0 %965
  %967 = vrot.lane.b32.xlu0 %v384, 112
  %v968 = vpop.permute.xlu0 %967
  %969 = vrot.lane.b32.xlu0 %v386, 112
  %v970 = vpop.permute.xlu0 %969
  %971 = vrot.lane.b32.xlu0 %v388, 112
  %v972 = vpop.permute.xlu0 %971
  %973 = vrot.lane.b32.xlu0 %v390, 112
  %v974 = vpop.permute.xlu0 %973
  %975 = vrot.lane.b32.xlu0 %v392, 112
  %v976 = vpop.permute.xlu0 %975
  %977 = vrot.lane.b32.xlu0 %v394, 112
  %v978 = vpop.permute.xlu0 %977
  %vm979 = vcmp.lt.s32.totalorder %v426, 112
  %v980 = vsel %vm979, %v956, %v968
  %v981 = vsel %vm979, %v958, %v970
  %v982 = vsel %vm979, %v960, %v972
  %v983 = vsel %vm979, %v962, %v974
  %v984 = vsel %vm979, %v964, %v976
  %v985 = vsel %vm979, %v966, %v978
  %v986 = vsel %vm979, %v968, %v956
  %v987 = vsel %vm979, %v970, %v958
  %v988 = vsel %vm979, %v972, %v960
  %v989 = vsel %vm979, %v974, %v962
  %v990 = vsel %vm979, %v976, %v964
  %v991 = vsel %vm979, %v978, %v966
  %992 = vset.pattern.permute.xlu0 7
  %993 = vperm.xlu0 %992, %v395
  %v994 = vpop.permute.xlu0 %993
  %996 = vset.pattern.permute.xlu0 7
  %997 = vperm.xlu0 %996, %v396
  %v998 = vpop.permute.xlu0 %997
  %1000 = vset.pattern.permute.xlu0 7
  %1001 = vperm.xlu0 %1000, %v397
  %v1002 = vpop.permute.xlu0 %1001
  %1004 = vset.pattern.permute.xlu0 7
  %1005 = vperm.xlu0 %1004, %v398
  %v1006 = vpop.permute.xlu0 %1005
  %1008 = vset.pattern.permute.xlu0 7
  %1009 = vperm.xlu0 %1008, %v399
  %v1010 = vpop.permute.xlu0 %1009
  %1012 = vset.pattern.permute.xlu0 7
  %1013 = vperm.xlu0 %1012, %v400
  %v1014 = vpop.permute.xlu0 %1013
  %v1016 = vmul.f32 %v980, %v994
  %v1017 = vmul.f32 %v986, %v994
  %v1018 = vmul.f32 %v981, %v998
  %v1019 = vmul.f32 %v987, %v998
  %v1020 = vmul.f32 %v982, %v1002
  %v1021 = vmul.f32 %v988, %v1002
  %v1022 = vmul.f32 %v983, %v1006
  %v1023 = vmul.f32 %v989, %v1006
  %v1024 = vmul.f32 %v984, %v1010
  %v1025 = vmul.f32 %v990, %v1010
  %v1026 = vmul.f32 %v985, %v1014
  %v1027 = vmul.f32 %v991, %v1014
  %v1028 = vadd.f32 %v943, %v1016
  %v1029 = vadd.f32 %v944, %v1017
  %v1030 = vadd.f32 %v945, %v1018
  %v1031 = vadd.f32 %v946, %v1019
  %v1032 = vadd.f32 %v947, %v1020
  %v1033 = vadd.f32 %v948, %v1021
  %v1034 = vadd.f32 %v949, %v1022
  %v1035 = vadd.f32 %v950, %v1023
  %v1036 = vadd.f32 %v951, %v1024
  %v1037 = vadd.f32 %v952, %v1025
  %v1038 = vadd.f32 %v953, %v1026
  %v1039 = vadd.f32 %v954, %v1027
  %1040 = vrot.lane.b32.xlu0 %v383, 111
  %v1041 = vpop.permute.xlu0 %1040
  %1042 = vrot.lane.b32.xlu0 %v385, 111
  %v1043 = vpop.permute.xlu0 %1042
  %1044 = vrot.lane.b32.xlu0 %v387, 111
  %v1045 = vpop.permute.xlu0 %1044
  %1046 = vrot.lane.b32.xlu0 %v389, 111
  %v1047 = vpop.permute.xlu0 %1046
  %1048 = vrot.lane.b32.xlu0 %v391, 111
  %v1049 = vpop.permute.xlu0 %1048
  %1050 = vrot.lane.b32.xlu0 %v393, 111
  %v1051 = vpop.permute.xlu0 %1050
  %1052 = vrot.lane.b32.xlu0 %v384, 111
  %v1053 = vpop.permute.xlu0 %1052
  %1054 = vrot.lane.b32.xlu0 %v386, 111
  %v1055 = vpop.permute.xlu0 %1054
  %1056 = vrot.lane.b32.xlu0 %v388, 111
  %v1057 = vpop.permute.xlu0 %1056
  %1058 = vrot.lane.b32.xlu0 %v390, 111
  %v1059 = vpop.permute.xlu0 %1058
  %1060 = vrot.lane.b32.xlu0 %v392, 111
  %v1061 = vpop.permute.xlu0 %1060
  %1062 = vrot.lane.b32.xlu0 %v394, 111
  %v1063 = vpop.permute.xlu0 %1062
  %vm1064 = vcmp.lt.s32.totalorder %v426, 111
  %v1065 = vsel %vm1064, %v1041, %v1053
  %v1066 = vsel %vm1064, %v1043, %v1055
  %v1067 = vsel %vm1064, %v1045, %v1057
  %v1068 = vsel %vm1064, %v1047, %v1059
  %v1069 = vsel %vm1064, %v1049, %v1061
  %v1070 = vsel %vm1064, %v1051, %v1063
  %v1071 = vsel %vm1064, %v1053, %v1041
  %v1072 = vsel %vm1064, %v1055, %v1043
  %v1073 = vsel %vm1064, %v1057, %v1045
  %v1074 = vsel %vm1064, %v1059, %v1047
  %v1075 = vsel %vm1064, %v1061, %v1049
  %v1076 = vsel %vm1064, %v1063, %v1051
  %1077 = vset.pattern.permute.xlu0 8
  %1078 = vperm.xlu0 %1077, %v395
  %v1079 = vpop.permute.xlu0 %1078
  %1081 = vset.pattern.permute.xlu0 8
  %1082 = vperm.xlu0 %1081, %v396
  %v1083 = vpop.permute.xlu0 %1082
  %1085 = vset.pattern.permute.xlu0 8
  %1086 = vperm.xlu0 %1085, %v397
  %v1087 = vpop.permute.xlu0 %1086
  %1089 = vset.pattern.permute.xlu0 8
  %1090 = vperm.xlu0 %1089, %v398
  %v1091 = vpop.permute.xlu0 %1090
  %1093 = vset.pattern.permute.xlu0 8
  %1094 = vperm.xlu0 %1093, %v399
  %v1095 = vpop.permute.xlu0 %1094
  %1097 = vset.pattern.permute.xlu0 8
  %1098 = vperm.xlu0 %1097, %v400
  %v1099 = vpop.permute.xlu0 %1098
  %v1101 = vmul.f32 %v1065, %v1079
  %v1102 = vmul.f32 %v1071, %v1079
  %v1103 = vmul.f32 %v1066, %v1083
  %v1104 = vmul.f32 %v1072, %v1083
  %v1105 = vmul.f32 %v1067, %v1087
  %v1106 = vmul.f32 %v1073, %v1087
  %v1107 = vmul.f32 %v1068, %v1091
  %v1108 = vmul.f32 %v1074, %v1091
  %v1109 = vmul.f32 %v1069, %v1095
  %v1110 = vmul.f32 %v1075, %v1095
  %v1111 = vmul.f32 %v1070, %v1099
  %v1112 = vmul.f32 %v1076, %v1099
  %v1113 = vadd.f32 %v1028, %v1101
  %v1114 = vadd.f32 %v1029, %v1102
  %v1115 = vadd.f32 %v1030, %v1103
  %v1116 = vadd.f32 %v1031, %v1104
  %v1117 = vadd.f32 %v1032, %v1105
  %v1118 = vadd.f32 %v1033, %v1106
  %v1119 = vadd.f32 %v1034, %v1107
  %v1120 = vadd.f32 %v1035, %v1108
  %v1121 = vadd.f32 %v1036, %v1109
  %v1122 = vadd.f32 %v1037, %v1110
  %v1123 = vadd.f32 %v1038, %v1111
  %v1124 = vadd.f32 %v1039, %v1112
  %1125 = vst [vmem:[%s6] sm:$0xff] %v1113
  %1126 = vst [vmem:[%s6 + $0x8] sm:$0xff] %v1114
  %1127 = vst [vmem:[%s6 + $0x10] sm:$0xff] %v1115
  %1128 = vst [vmem:[%s6 + $0x18] sm:$0xff] %v1116
  %1129 = vst [vmem:[%s6 + $0x20] sm:$0xff] %v1117
  %1130 = vst [vmem:[%s6 + $0x28] sm:$0xff] %v1118
  %1131 = vst [vmem:[%s6 + $0x30] sm:$0xff] %v1119
  %1132 = vst [vmem:[%s6 + $0x38] sm:$0xff] %v1120
  %1133 = vst [vmem:[%s6 + $0x40] sm:$0xff] %v1121
  %1134 = vst [vmem:[%s6 + $0x48] sm:$0xff] %v1122
  %1135 = vst [vmem:[%s6 + $0x50] sm:$0xff] %v1123
  %1136 = vst [vmem:[%s6 + $0x58] sm:$0xff] %v1124
  // Predicated region
  $region26: #{fused_forward.1} parent=0 // pred_check
    _
  $region27: #{fused_forward.1} parent=0 // pred_check_branch
    %1138 = sbr.rel (0) target = $region29
  $region28: #{fused_forward.1} parent=0 // pred_region
    _
  $region29: #{fused_forward.1} parent=0 // pred_fallthru
    _
  // Predicated region
  $region30: #{fused_forward.1} parent=0 // pred_check
    _
  $region31: #{fused_forward.1} parent=0 // pred_check_branch
    %1140 = sbr.rel (0) target = $region33
  $region32: #{fused_forward.1} parent=0 // pred_region
    _
  $region33: #{fused_forward.1} parent=0 // pred_fallthru
    _

</llo_original>
